<compile_context>
chip_gen: v6e
topology: v6e:2x2x1
jax: 0.10.0
libtpu: 0.0.40
codegen_flags: <defaults>
</compile_context>

<pallas_src>
import functools

import jax
import jax.numpy as jnp
import numpy as np
from jax.experimental import pallas as pl
from jax.experimental.pallas import tpu as pltpu


# ----------------------------- activation ----------------------------------
def _activation(h):
    # SteerableModel defaults: activation = identity, bias=False.
    return h


# ------------- parameter-only preprocessing (plain JAX, run once) ------------
def cross_operator(n):
    return jnp.array(
        [[0.0, -n[2], n[1]],
         [n[2], 0.0, -n[0]],
         [-n[1], n[0], 0.0]], dtype=jnp.float32)


def rotation_matrix(axis_angle):
    # torch.matrix_exp of a 3x3 skew-symmetric matrix == closed-form Rodrigues.
    w = axis_angle[:3].astype(jnp.float32)
    theta = jnp.sqrt(jnp.sum(w * w))
    theta = jnp.maximum(theta, 1e-12)
    K = cross_operator(w)
    eye = jnp.eye(3, dtype=jnp.float32)
    return (eye + (jnp.sin(theta) / theta) * K
            + ((1.0 - jnp.cos(theta)) / (theta * theta)) * (K @ K))


def compute_vs(init_rotations, axis_angle, M, v, H0, n_points):
    """Builds the steerable weighting vector vs, shape (H0, n_points*4*5)."""
    R_B = rotation_matrix(axis_angle)
    # T_r = R_r @ R_B @ R_r^T
    T = jnp.einsum('rij,jk,rlk->ril', init_rotations, R_B, init_rotations)
    rv = jnp.einsum('rij,j->ri', T, v[:3])                          # (R, 3)
    rv4 = jnp.concatenate(
        [rv, jnp.broadcast_to(v[3:], (rv.shape[0], 1))], axis=1)    # (R, 4)
    rotated = rv4 @ M                                               # (R, 4)
    vs = jnp.repeat(rotated.reshape(-1), 5)                         # (20R,)
    return vs.reshape(H0, n_points * 4 * 5)


def fold_steerable_params(params, n_points):
    """Folds the steerable weighting + first-layer weight + 4x point repeat into
    a single pre-transposed matrix, and pre-transposes the later weights.
    Depends only on parameters — call once per parameter update."""
    hidden_sizes = params['hidden_sizes']
    H0 = hidden_sizes[0]
    vs = compute_vs(params['init_rotations'], params['axis_angle'],
                    params['M'], params['v'], H0, n_points)
    V = vs * params['W0']                                   # (H0, 20n)
    Vsum = V.reshape(H0, n_points, 4, 5).sum(axis=2)        # (H0, n, 5)
    A = Vsum[:, :, :3].reshape(H0, 3 * n_points)            # pairs with coords
    C = Vsum[:, :, 4]                                       # pairs with -||x||^2/2
    bcol = jnp.sum(Vsum[:, :, 3], axis=1, keepdims=True)    # pairs with the -1 col
    Wfirst_T = jnp.concatenate([A, C, bcol], axis=1).T      # (4n+1, H0)
    layer_Wts = tuple(jnp.asarray(W, jnp.float32).T         # (in+2, out) each
                      for W in list(params['Ws']) + [params['Wout']])
    return Wfirst_T, layer_Wts


# ----------------------------- Pallas kernel --------------------------------
def make_kernel(n_layers, in_dims):
    """n_layers later (augmented) layers; in_dims[li] is the un-augmented input
    width of layer li. Each weight ref is pre-transposed (in+2, out): the last
    two rows pair with the [-1, -||h||^2/2] augmentation and are folded into
    the matmul via static slices."""
    def kernel(xa_ref, wf_ref, *rest):
        *w_refs, out_ref = rest
        # folded first layer: single MXU matmul, weights already transposed.
        h = _activation(jnp.dot(xa_ref[...], wf_ref[...],
                                preferred_element_type=jnp.float32))
        for li in range(n_layers):
            Wt = w_refs[li][...]                      # (in+2, out)
            f = in_dims[li]
            ssq = jnp.sum(h * h, axis=1, keepdims=True)
            h_new = (jnp.dot(h, Wt[:f, :], preferred_element_type=jnp.float32)
                     - Wt[f:f + 1, :]                 # "-1" augmentation column
                     - 0.5 * ssq * Wt[f + 1:f + 2, :])  # "-||h||^2/2" column
            if li < n_layers - 1:                     # no activation after out_layer
                h_new = _activation(h_new)
            h = h_new
        out_ref[...] = h
    return kernel


# ----------------------------- jitted forward --------------------------------
@jax.jit
def steerable_forward_pallas(x, Wfirst_T, layer_Wts):
    B, n_points, d = x.shape
    assert d == 3, "forward() requires input_shape[1] == 3 (so d + 2 == 5)"

    x = x.astype(jnp.float32)
    x2 = x.reshape(B, d * n_points)                       # same bytes as x, once
    s = -0.5 * jnp.sum(x * x, axis=-1)                    # (B, n)
    xa = jnp.concatenate(
        [x2, s, -jnp.ones((B, 1), jnp.float32)], axis=1)  # (B, 4n+1)
    in_feat = xa.shape[1]

    in_dims = tuple(int(Wt.shape[0]) - 2 for Wt in layer_Wts)
    out_dim = int(layer_Wts[-1].shape[1])
    n_layers = len(layer_Wts)

    # Batch tiling: TB = B when small (full-dim block is always legal); for
    # large B use a 256-row tile (multiple of 8 for f32 sublanes) and pad.
    TB = B if B <= 256 else 256
    Bp = pl.cdiv(B, TB) * TB
    if Bp != B:
        xa = jnp.pad(xa, ((0, Bp - B), (0, 0)))

    in_specs = [pl.BlockSpec((TB, in_feat), lambda i: (i, 0)),
                pl.BlockSpec(Wfirst_T.shape, lambda i: (0, 0))]
    in_specs += [pl.BlockSpec(Wt.shape, lambda i: (0, 0)) for Wt in layer_Wts]

    out = pl.pallas_call(
        make_kernel(n_layers, in_dims),
        out_shape=jax.ShapeDtypeStruct((Bp, out_dim), jnp.float32),
        grid=(Bp // TB,),
        in_specs=in_specs,
        out_specs=pl.BlockSpec((TB, out_dim), lambda i: (i, 0)),
        compiler_params=pltpu.CompilerParams(
            dimension_semantics=("parallel",)),
    )(xa, Wfirst_T, *layer_Wts)
    return out[:B]


# ------------------ pure-JAX reference (torch-literal path) -----------------
def steerable_forward_reference(x, params):
    hidden_sizes = params['hidden_sizes']
    H0 = hidden_sizes[0]
    B, n_points, d = x.shape
    v, M = params['v'], params['M']
    Rinit = params['init_rotations']
    R_B = rotation_matrix(params['axis_angle'])
    vs_list = []
    for i in range(Rinit.shape[0]):
        T = Rinit[i] @ R_B @ Rinit[i].T
        rv = T @ v[:3]
        rv = jnp.concatenate([rv, v[-1:]]) @ M
        vs_list.append(rv)
    vs = jnp.concatenate(vs_list, axis=-1)
    vs = jnp.repeat(vs, 5).reshape(H0, n_points * 4 * 5)

    xx = jnp.tile(x, (1, H0, 1)).reshape(B, H0, n_points, d)
    xx = jnp.repeat(xx, 4, axis=2)
    e1 = -jnp.ones((B, H0, 4 * n_points, 1), jnp.float32)
    e2 = -jnp.sum(xx ** 2, axis=-1) / 2
    xx = jnp.concatenate([xx, e1, e2[..., None]], axis=-1)
    xx = xx.reshape(B, H0, 4 * n_points * (d + 2)) * vs
    h = _activation(jnp.einsum('bhj,hj->bh', xx, params['W0']))
    h = jnp.concatenate(
        [h, -jnp.ones((B, 1), jnp.float32),
         -jnp.sum(h ** 2, axis=1, keepdims=True) / 2], axis=1)
    for W in params['Ws']:
        h = _activation(h @ W.T)
        h = jnp.concatenate(
            [h, -jnp.ones((B, 1), jnp.float32),
             -jnp.sum(h ** 2, axis=1, keepdims=True) / 2], axis=1)
    return h @ params['Wout'].T


# --------------------------------- main --------------------------------------
if __name__ == "__main__":
    B, n_points, d = 2, 4, 3
    hidden_sizes = [8, 16]
    output_dim = 6
    H0 = hidden_sizes[0]
    n_rot = H0 * n_points            # len(init_rotations) required by forward()
    M1 = 4 * n_points * (d + 2)      # first-layer fan-in = 80

    key = jax.random.PRNGKey(0)
    kx, k0, k1, k2, kr = jax.random.split(key, 5)
    x = jax.random.normal(kx, (B, n_points, d), jnp.float32)

    def linear_init(k, out_f, in_f):
        lim = 1.0 / np.sqrt(in_f)
        return jax.random.uniform(k, (out_f, in_f), jnp.float32, -lim, lim)

    W0 = linear_init(k0, hidden_sizes[0], M1)
    W1 = linear_init(k1, hidden_sizes[1], hidden_sizes[0] + 2)
    Wout = linear_init(k2, output_dim, hidden_sizes[1] + 2)

    init_axes = jax.random.normal(kr, (n_rot, 3), jnp.float32)
    init_rotations = jax.vmap(rotation_matrix)(init_axes)

    params = dict(
        hidden_sizes=hidden_sizes,
        axis_angle=jnp.ones((4,), jnp.float32),       # default init_axis_angle
        init_rotations=init_rotations,
        M=0.5 * jnp.asarray(np.array([[1, 1, 1, 1], [1, -1, -1, 1],
                                      [-1, 1, -1, 1], [-1, -1, 1, 1]]).T,
                            dtype=np.float32),
        v=0.5 * jnp.ones((4,), jnp.float32),
        W0=W0, Ws=[W1], Wout=Wout,
    )

    # Parameter-only folding: done ONCE, outside the per-forward hot path.
    Wfirst_T, layer_Wts = fold_steerable_params(params, n_points)

    out = steerable_forward_pallas(x, Wfirst_T, layer_Wts)
    out = jax.block_until_ready(out)

    ref = steerable_forward_reference(x, params)
    assert out.shape == (B, output_dim)
    np.testing.assert_allclose(np.asarray(out), np.asarray(ref),
                               rtol=1e-4, atol=1e-4)
    print("KERNEL_OK")
</pallas_src>

<mosaic_0001>
module attributes {stable_mosaic.version = 11 : i64} {
  func.func @kernel(%arg0: i32, %arg1: memref<2x17xf32, #tpu.memory_space<vmem>>, %arg2: memref<17x8xf32, #tpu.memory_space<vmem>>, %arg3: memref<10x16xf32, #tpu.memory_space<vmem>>, %arg4: memref<18x6xf32, #tpu.memory_space<vmem>>, %arg5: memref<2x6xf32, #tpu.memory_space<vmem>>) attributes {dimension_semantics = [#tpu.dimension_semantics<parallel>], iteration_bounds = array<i64: 1>, scalar_prefetch = 0 : i64, scratch_operands = 0 : i64, tpu.core_type = #tpu.core_type<tc>, window_params = [{transform_indices = @transform_0, window_bounds = array<i64: 2, 17>}, {pipeline_mode = #tpu.pipeline_mode<synchronous>, transform_indices = @transform_1, window_bounds = array<i64: 17, 8>}, {pipeline_mode = #tpu.pipeline_mode<synchronous>, transform_indices = @transform_2, window_bounds = array<i64: 10, 16>}, {pipeline_mode = #tpu.pipeline_mode<synchronous>, transform_indices = @transform_3, window_bounds = array<i64: 18, 6>}, {transform_indices = @transform_4, window_bounds = array<i64: 2, 6>}]} {
    %c0 = arith.constant 0 : index
    %c0_0 = arith.constant 0 : index
    %0 = vector.load %arg1[%c0, %c0_0] : memref<2x17xf32, #tpu.memory_space<vmem>>, vector<2x17xf32>
    %c0_1 = arith.constant 0 : index
    %c0_2 = arith.constant 0 : index
    %1 = vector.load %arg2[%c0_1, %c0_2] : memref<17x8xf32, #tpu.memory_space<vmem>>, vector<17x8xf32>
    %cst = arith.constant dense<0.000000e+00> : vector<2x8xf32>
    %2 = tpu.matmul %0, %1, %cst {dimension_numbers = #tpu.dot_dimension_numbers<[1], [0], [0], [1], [0, 0, 1, 1], [], []>} : vector<2x17xf32>, vector<17x8xf32>, vector<2x8xf32> -> vector<2x8xf32>
    %c0_3 = arith.constant 0 : index
    %c0_4 = arith.constant 0 : index
    %3 = vector.load %arg3[%c0_3, %c0_4] : memref<10x16xf32, #tpu.memory_space<vmem>>, vector<10x16xf32>
    %4 = arith.mulf %2, %2 : vector<2x8xf32>
    %cst_5 = arith.constant dense<0.000000e+00> : vector<2xf32>
    %5 = vector.multi_reduction <add>, %4, %cst_5 [1] : vector<2x8xf32> to vector<2xf32>
    %6 = vector.shape_cast %5 : vector<2xf32> to vector<2x1xf32>
    %7 = vector.extract_strided_slice %3 {offsets = [0, 0], sizes = [8, 16], strides = [1, 1]} : vector<10x16xf32> to vector<8x16xf32>
    %cst_6 = arith.constant dense<0.000000e+00> : vector<2x16xf32>
    %8 = tpu.matmul %2, %7, %cst_6 {dimension_numbers = #tpu.dot_dimension_numbers<[1], [0], [0], [1], [0, 0, 1, 1], [], []>} : vector<2x8xf32>, vector<8x16xf32>, vector<2x16xf32> -> vector<2x16xf32>
    %9 = vector.extract_strided_slice %3 {offsets = [8, 0], sizes = [1, 16], strides = [1, 1]} : vector<10x16xf32> to vector<1x16xf32>
    %10 = vector.broadcast %9 : vector<1x16xf32> to vector<2x16xf32>
    %11 = arith.subf %8, %10 : vector<2x16xf32>
    %cst_7 = arith.constant 5.000000e-01 : f32
    %12 = vector.broadcast %cst_7 : f32 to vector<2x1xf32>
    %13 = arith.mulf %12, %6 : vector<2x1xf32>
    %14 = vector.extract_strided_slice %3 {offsets = [9, 0], sizes = [1, 16], strides = [1, 1]} : vector<10x16xf32> to vector<1x16xf32>
    %15 = vector.broadcast %13 : vector<2x1xf32> to vector<2x16xf32>
    %16 = vector.broadcast %14 : vector<1x16xf32> to vector<2x16xf32>
    %17 = arith.mulf %15, %16 : vector<2x16xf32>
    %18 = arith.subf %11, %17 : vector<2x16xf32>
    %c0_8 = arith.constant 0 : index
    %c0_9 = arith.constant 0 : index
    %19 = vector.load %arg4[%c0_8, %c0_9] : memref<18x6xf32, #tpu.memory_space<vmem>>, vector<18x6xf32>
    %20 = arith.mulf %18, %18 : vector<2x16xf32>
    %cst_10 = arith.constant dense<0.000000e+00> : vector<2xf32>
    %21 = vector.multi_reduction <add>, %20, %cst_10 [1] : vector<2x16xf32> to vector<2xf32>
    %22 = vector.shape_cast %21 : vector<2xf32> to vector<2x1xf32>
    %23 = vector.extract_strided_slice %19 {offsets = [0, 0], sizes = [16, 6], strides = [1, 1]} : vector<18x6xf32> to vector<16x6xf32>
    %cst_11 = arith.constant dense<0.000000e+00> : vector<2x6xf32>
    %24 = tpu.matmul %18, %23, %cst_11 {dimension_numbers = #tpu.dot_dimension_numbers<[1], [0], [0], [1], [0, 0, 1, 1], [], []>} : vector<2x16xf32>, vector<16x6xf32>, vector<2x6xf32> -> vector<2x6xf32>
    %25 = vector.extract_strided_slice %19 {offsets = [16, 0], sizes = [1, 6], strides = [1, 1]} : vector<18x6xf32> to vector<1x6xf32>
    %26 = vector.broadcast %25 : vector<1x6xf32> to vector<2x6xf32>
    %27 = arith.subf %24, %26 : vector<2x6xf32>
    %cst_12 = arith.constant 5.000000e-01 : f32
    %28 = vector.broadcast %cst_12 : f32 to vector<2x1xf32>
    %29 = arith.mulf %28, %22 : vector<2x1xf32>
    %30 = vector.extract_strided_slice %19 {offsets = [17, 0], sizes = [1, 6], strides = [1, 1]} : vector<18x6xf32> to vector<1x6xf32>
    %31 = vector.broadcast %29 : vector<2x1xf32> to vector<2x6xf32>
    %32 = vector.broadcast %30 : vector<1x6xf32> to vector<2x6xf32>
    %33 = arith.mulf %31, %32 : vector<2x6xf32>
    %34 = arith.subf %27, %33 : vector<2x6xf32>
    %c0_13 = arith.constant 0 : index
    %c0_14 = arith.constant 0 : index
    %35 = vector.load %arg5[%c0_13, %c0_14] : memref<2x6xf32, #tpu.memory_space<vmem>>, vector<2x6xf32>
    tpu.vector_store %arg5[%c0_13, %c0_14], %34 {strides = array<i32>} : memref<2x6xf32, #tpu.memory_space<vmem>>, vector<2x6xf32>,
    return
  }
  func.func @transform_0(%arg0: i32) -> (i32, i32) {
    %c0_i32 = arith.constant 0 : i32
    %c0_i32_0 = arith.constant 0 : i32
    return %arg0, %c0_i32 : i32, i32
  }
  func.func @transform_1(%arg0: i32) -> (i32, i32) {
    %c0_i32 = arith.constant 0 : i32
    %c0_i32_0 = arith.constant 0 : i32
    %c0_i32_1 = arith.constant 0 : i32
    return %c0_i32, %c0_i32_0 : i32, i32
  }
  func.func @transform_2(%arg0: i32) -> (i32, i32) {
    %c0_i32 = arith.constant 0 : i32
    %c0_i32_0 = arith.constant 0 : i32
    %c0_i32_1 = arith.constant 0 : i32
    return %c0_i32, %c0_i32_0 : i32, i32
  }
  func.func @transform_3(%arg0: i32) -> (i32, i32) {
    %c0_i32 = arith.constant 0 : i32
    %c0_i32_0 = arith.constant 0 : i32
    %c0_i32_1 = arith.constant 0 : i32
    return %c0_i32, %c0_i32_0 : i32, i32
  }
  func.func @transform_4(%arg0: i32) -> (i32, i32) {
    %c0_i32 = arith.constant 0 : i32
    %c0_i32_0 = arith.constant 0 : i32
    return %arg0, %c0_i32 : i32, i32
  }
}

</mosaic_0001>

<llo_original>
// kernel: steerable_forward_pallas.1
$region0: #{steerable_forward_pallas.1}
  #allocation0 [shape = 'u32[]', space=smem, size = 0x4, offset = 0x4, fixed_abs, tag = 'smem constant byte address 0x4 - core index']
  #allocation1 [shape = 'u32[144,128]{1,0:T(1,128)}', space=vmem, size = 0x12000, scoped, tag = 'internal scratch']
  %s0 = inlined_call_operand.vmem [shape: f32[2,17], index: 0, kind: input, shape index: {}]
  %s1 = inlined_call_operand.vmem [shape: f32[17,8], index: 1, kind: input, shape index: {}]
  %s2 = inlined_call_operand.vmem [shape: f32[10,16], index: 2, kind: input, shape index: {}]
  %s3 = inlined_call_operand.vmem [shape: f32[18,6], index: 3, kind: input, shape index: {}]
  %s4 = inlined_call_operand.hbm [shape: f32[2,6], index: 4, kind: output, shape index: {}]
  %s5 = sld [smem:[#allocation0]]
  $region26: #{steerable_forward_pallas.1} parent=0
    _
  %s7 = ssub.s32 1, %s5
  %s8 = scalar_select 0, %s7, %s5
  $region1: #{steerable_forward_pallas.1} parent=0
    #allocation2 [shape = 'u8[1024]{0}', space=vmem, size = 0x400, scoped, tag = 'output window, operand 0, single buffered']
    #allocation3 [shape = 's32[1]{0}', space=sflag, size = 0x4, scoped, tag = 'scoped memory for steerable_forward_pallas.1']
    %9 = vsyncpa [#allocation3], 0
    // Predicated region
    $region2: #{steerable_forward_pallas.1} parent=1 // pred_check
      _
    $region3: #{steerable_forward_pallas.1} parent=1 // pred_check_branch
      %11 = sbr.rel (0) target = $region5
    $region4: #{steerable_forward_pallas.1} parent=1 // pred_region
      _
    $region5: #{steerable_forward_pallas.1} parent=1 // pred_fallthru
      _
    // Predicated region
    $region6: #{steerable_forward_pallas.1} parent=1 // pred_check
      _
    $region7: #{steerable_forward_pallas.1} parent=1 // pred_check_branch
      %13 = sbr.rel (0) target = $region9
    $region8: #{steerable_forward_pallas.1} parent=1 // pred_region
      _
    $region9: #{steerable_forward_pallas.1} parent=1 // pred_fallthru
      _
    // Predicated region
    $region10: #{steerable_forward_pallas.1} parent=1 // pred_check
      _
    $region11: #{steerable_forward_pallas.1} parent=1 // pred_check_branch
      %15 = sbr.rel (0) target = $region13
    $region12: #{steerable_forward_pallas.1} parent=1 // pred_region
      _
    $region13: #{steerable_forward_pallas.1} parent=1 // pred_fallthru
      _
    // Predicated region
    $region14: #{steerable_forward_pallas.1} parent=1 // pred_check
      _
    $region15: #{steerable_forward_pallas.1} parent=1 // pred_check_branch
      %17 = sbr.rel (0) target = $region17
    $region16: #{steerable_forward_pallas.1} parent=1 // pred_region
      _
    $region17: #{steerable_forward_pallas.1} parent=1 // pred_fallthru
      _
    %v18 = vld [vmem:[%s0] sm:$0x3]
    %v19 = vld [vmem:[%s1] sm:$0xff]
    %v20 = vld [vmem:[%s1 + $0x8] sm:$0xff]
    %v21 = vld [vmem:[%s1 + $0x10] sm:$0x1]
    %vm22 = vcmask 138240
    %v24 = vsel %vm22, %v18, 0
    %vm26 = vcmask 1040384
    %v28 = vsel %vm26, %v21, 0
    %30 = vmatprep.subr.mxu0 0.0
    %31 = vmatpush1.msra.mxu0 0.0
    %32 = vmatprep.subr.mxu0 0.0
    %33 = vmatpush1.msra.mxu0 0.0
    %34 = vmatprep.subr.mxu0 0.0
    %35 = vmatpush1.msra.mxu0 0.0
    %36 = vmatprep.subr.mxu0 0.0
    %37 = vmatpush1.msra.mxu0 0.0
    %38 = vmatprep.subr.mxu0 0.0
    %39 = vmatpush1.msra.mxu0 0.0
    %40 = vmatprep.subr.mxu0 0.0
    %41 = vmatpush1.msra.mxu0 0.0
    %42 = vmatprep.subr.mxu0 0.0
    %43 = vmatpush1.msra.mxu0 0.0
    %44 = vmatprep.subr.mxu0 0.0
    %45 = vmatpush1.msra.mxu0 0.0
    %46 = vmatprep.subr.mxu0 0.0
    %47 = vmatpush1.msra.mxu0 0.0
    %48 = vmatprep.subr.mxu0 0.0
    %49 = vmatpush1.msra.mxu0 0.0
    %50 = vmatprep.subr.mxu0 0.0
    %51 = vmatpush1.msra.mxu0 0.0
    %52 = vmatprep.subr.mxu0 0.0
    %53 = vmatpush1.msra.mxu0 0.0
    %54 = vmatprep.subr.mxu0 0.0
    %55 = vmatpush1.msra.mxu0 0.0
    %56 = vmatprep.subr.mxu0 0.0
    %57 = vmatpush1.msra.mxu0 %v28
    %58 = vmatprep.subr.mxu0 0.0
    %59 = vmatpush1.msra.mxu0 %v20
    %60 = vmatprep.subr.mxu0 0.0
    %61 = vmatpush1.msra.mxu0 %v19
    %62 = vmatprep.subr.mxu0 0.0
    %63 = vmatpush2.msra.mxu0 0.0
    %64 = vmatprep.subr.mxu0 0.0
    %65 = vmatpush2.msra.mxu0 0.0
    %66 = vmatprep.subr.mxu0 0.0
    %67 = vmatpush2.msra.mxu0 0.0
    %68 = vmatprep.subr.mxu0 0.0
    %69 = vmatpush2.msra.mxu0 0.0
    %70 = vmatprep.subr.mxu0 0.0
    %71 = vmatpush2.msra.mxu0 0.0
    %72 = vmatprep.subr.mxu0 0.0
    %73 = vmatpush2.msra.mxu0 0.0
    %74 = vmatprep.subr.mxu0 0.0
    %75 = vmatpush2.msra.mxu0 0.0
    %76 = vmatprep.subr.mxu0 0.0
    %77 = vmatpush2.msra.mxu0 0.0
    %78 = vmatprep.subr.mxu0 0.0
    %79 = vmatpush2.msra.mxu0 0.0
    %80 = vmatprep.subr.mxu0 0.0
    %81 = vmatpush2.msra.mxu0 0.0
    %82 = vmatprep.subr.mxu0 0.0
    %83 = vmatpush2.msra.mxu0 0.0
    %84 = vmatprep.subr.mxu0 0.0
    %85 = vmatpush2.msra.mxu0 0.0
    %86 = vmatprep.subr.mxu0 0.0
    %87 = vmatpush2.msra.mxu0 0.0
    %88 = vmatprep.subr.mxu0 0.0
    %89 = vmatpush2.msra.mxu0 0.0
    %90 = vmatprep.subr.mxu0 0.0
    %91 = vmatpush2.msra.mxu0 0.0
    %92 = vmatprep.subr.mxu0 0.0
    %93 = vmatpush2.msra.mxu0 0.0
    %94 = vmatprep.mubr.f32.mxu0 0.0
    %95 = vmatmul.mubr.f32.gmra.mxu0 %v24
    %v96 = vpop.f32.mrf.mxu0
    %v97 = vadd.f32 0.0, %v96
    %v98 = vpop.f32.mrf.mxu0
    %99 = vdwg.mxu0
    %v100 = vld [vmem:[%s2] sm:$0xff]
    %v101 = vld [vmem:[%s2 + $0x8] sm:$0x3]
    %v102 = vmul.f32 %v97, %v97
    %vm103 = vcmask 58368
    %v104 = vsel %vm103, %v102, 0.0
    %105 = vadd.xlane.f32.xlu0 %v104
    %v106 = vpop.xlane.xlu0 %105
    %vm107 = vcmask 64512
    %v109 = vsel %vm107, %v97, 0
    %111 = vmatprep.subr.mxu0 0.0
    %112 = vmatpush1.msra.mxu0 0.0
    %113 = vmatprep.subr.mxu0 0.0
    %114 = vmatpush1.msra.mxu0 0.0
    %115 = vmatprep.subr.mxu0 0.0
    %116 = vmatpush1.msra.mxu0 0.0
    %117 = vmatprep.subr.mxu0 0.0
    %118 = vmatpush1.msra.mxu0 0.0
    %119 = vmatprep.subr.mxu0 0.0
    %120 = vmatpush1.msra.mxu0 0.0
    %121 = vmatprep.subr.mxu0 0.0
    %122 = vmatpush1.msra.mxu0 0.0
    %123 = vmatprep.subr.mxu0 0.0
    %124 = vmatpush1.msra.mxu0 0.0
    %125 = vmatprep.subr.mxu0 0.0
    %126 = vmatpush1.msra.mxu0 0.0
    %127 = vmatprep.subr.mxu0 0.0
    %128 = vmatpush1.msra.mxu0 0.0
    %129 = vmatprep.subr.mxu0 0.0
    %130 = vmatpush1.msra.mxu0 0.0
    %131 = vmatprep.subr.mxu0 0.0
    %132 = vmatpush1.msra.mxu0 0.0
    %133 = vmatprep.subr.mxu0 0.0
    %134 = vmatpush1.msra.mxu0 0.0
    %135 = vmatprep.subr.mxu0 0.0
    %136 = vmatpush1.msra.mxu0 0.0
    %137 = vmatprep.subr.mxu0 0.0
    %138 = vmatpush1.msra.mxu0 0.0
    %139 = vmatprep.subr.mxu0 0.0
    %140 = vmatpush1.msra.mxu0 0.0
    %141 = vmatprep.subr.mxu0 0.0
    %142 = vmatpush1.msra.mxu0 %v100
    %143 = vmatprep.subr.mxu0 0.0
    %144 = vmatpush2.msra.mxu0 0.0
    %145 = vmatprep.subr.mxu0 0.0
    %146 = vmatpush2.msra.mxu0 0.0
    %147 = vmatprep.subr.mxu0 0.0
    %148 = vmatpush2.msra.mxu0 0.0
    %149 = vmatprep.subr.mxu0 0.0
    %150 = vmatpush2.msra.mxu0 0.0
    %151 = vmatprep.subr.mxu0 0.0
    %152 = vmatpush2.msra.mxu0 0.0
    %153 = vmatprep.subr.mxu0 0.0
    %154 = vmatpush2.msra.mxu0 0.0
    %155 = vmatprep.subr.mxu0 0.0
    %156 = vmatpush2.msra.mxu0 0.0
    %157 = vmatprep.subr.mxu0 0.0
    %158 = vmatpush2.msra.mxu0 0.0
    %159 = vmatprep.subr.mxu0 0.0
    %160 = vmatpush2.msra.mxu0 0.0
    %161 = vmatprep.subr.mxu0 0.0
    %162 = vmatpush2.msra.mxu0 0.0
    %163 = vmatprep.subr.mxu0 0.0
    %164 = vmatpush2.msra.mxu0 0.0
    %165 = vmatprep.subr.mxu0 0.0
    %166 = vmatpush2.msra.mxu0 0.0
    %167 = vmatprep.subr.mxu0 0.0
    %168 = vmatpush2.msra.mxu0 0.0
    %169 = vmatprep.subr.mxu0 0.0
    %170 = vmatpush2.msra.mxu0 0.0
    %171 = vmatprep.subr.mxu0 0.0
    %172 = vmatpush2.msra.mxu0 0.0
    %173 = vmatprep.subr.mxu0 0.0
    %174 = vmatpush2.msra.mxu0 0.0
    %175 = vmatprep.mubr.f32.mxu0 0.0
    %176 = vmatmul.mubr.f32.gmra.mxu0 %v109
    %v177 = vpop.f32.mrf.mxu0
    %v178 = vadd.f32 0.0, %v177
    %v179 = vpop.f32.mrf.mxu0
    %180 = vdwg.mxu0
    %v181 = vlaneseq
    %v182 = vshrl.u32 %v181, 7
    %v183 = vsub.s32 0, %v182
    %v184 = vrot.slane %v101, %v183
    %v185 = vsub.f32 %v178, %v184
    %v186 = vmul.f32 %v106, 0.5
    %v187 = vlaneseq
    %v188 = vshrl.u32 %v187, 7
    %v189 = vsub.s32 1, %v188
    %v190 = vrot.slane %v101, %v189
    %v191 = vmul.f32 %v186, %v190
    %v192 = vsub.f32 %v185, %v191
    %v193 = vld [vmem:[%s3] sm:$0xff]
    %v194 = vld [vmem:[%s3 + $0x8] sm:$0xff]
    %v195 = vld [vmem:[%s3 + $0x10] sm:$0x3]
    %v196 = vmul.f32 %v192, %v192
    %vm197 = vcmask 123904
    %v198 = vsel %vm197, %v196, 0.0
    %199 = vadd.xlane.f32.xlu0 %v198
    %v200 = vpop.xlane.xlu0 %199
    %vm201 = vcmask 130048
    %v203 = vsel %vm201, %v192, 0
    %205 = vmatprep.subr.mxu0 0.0
    %206 = vmatpush1.msra.mxu0 0.0
    %207 = vmatprep.subr.mxu0 0.0
    %208 = vmatpush1.msra.mxu0 0.0
    %209 = vmatprep.subr.mxu0 0.0
    %210 = vmatpush1.msra.mxu0 0.0
    %211 = vmatprep.subr.mxu0 0.0
    %212 = vmatpush1.msra.mxu0 0.0
    %213 = vmatprep.subr.mxu0 0.0
    %214 = vmatpush1.msra.mxu0 0.0
    %215 = vmatprep.subr.mxu0 0.0
    %216 = vmatpush1.msra.mxu0 0.0
    %217 = vmatprep.subr.mxu0 0.0
    %218 = vmatpush1.msra.mxu0 0.0
    %219 = vmatprep.subr.mxu0 0.0
    %220 = vmatpush1.msra.mxu0 0.0
    %221 = vmatprep.subr.mxu0 0.0
    %222 = vmatpush1.msra.mxu0 0.0
    %223 = vmatprep.subr.mxu0 0.0
    %224 = vmatpush1.msra.mxu0 0.0
    %225 = vmatprep.subr.mxu0 0.0
    %226 = vmatpush1.msra.mxu0 0.0
    %227 = vmatprep.subr.mxu0 0.0
    %228 = vmatpush1.msra.mxu0 0.0
    %229 = vmatprep.subr.mxu0 0.0
    %230 = vmatpush1.msra.mxu0 0.0
    %231 = vmatprep.subr.mxu0 0.0
    %232 = vmatpush1.msra.mxu0 0.0
    %233 = vmatprep.subr.mxu0 0.0
    %234 = vmatpush1.msra.mxu0 %v194
    %235 = vmatprep.subr.mxu0 0.0
    %236 = vmatpush1.msra.mxu0 %v193
    %237 = vmatprep.subr.mxu0 0.0
    %238 = vmatpush2.msra.mxu0 0.0
    %239 = vmatprep.subr.mxu0 0.0
    %240 = vmatpush2.msra.mxu0 0.0
    %241 = vmatprep.subr.mxu0 0.0
    %242 = vmatpush2.msra.mxu0 0.0
    %243 = vmatprep.subr.mxu0 0.0
    %244 = vmatpush2.msra.mxu0 0.0
    %245 = vmatprep.subr.mxu0 0.0
    %246 = vmatpush2.msra.mxu0 0.0
    %247 = vmatprep.subr.mxu0 0.0
    %248 = vmatpush2.msra.mxu0 0.0
    %249 = vmatprep.subr.mxu0 0.0
    %250 = vmatpush2.msra.mxu0 0.0
    %251 = vmatprep.subr.mxu0 0.0
    %252 = vmatpush2.msra.mxu0 0.0
    %253 = vmatprep.subr.mxu0 0.0
    %254 = vmatpush2.msra.mxu0 0.0
    %255 = vmatprep.subr.mxu0 0.0
    %256 = vmatpush2.msra.mxu0 0.0
    %257 = vmatprep.subr.mxu0 0.0
    %258 = vmatpush2.msra.mxu0 0.0
    %259 = vmatprep.subr.mxu0 0.0
    %260 = vmatpush2.msra.mxu0 0.0
    %261 = vmatprep.subr.mxu0 0.0
    %262 = vmatpush2.msra.mxu0 0.0
    %263 = vmatprep.subr.mxu0 0.0
    %264 = vmatpush2.msra.mxu0 0.0
    %265 = vmatprep.subr.mxu0 0.0
    %266 = vmatpush2.msra.mxu0 0.0
    %267 = vmatprep.subr.mxu0 0.0
    %268 = vmatpush2.msra.mxu0 0.0
    %269 = vmatprep.mubr.f32.mxu0 0.0
    %270 = vmatmul.mubr.f32.gmra.mxu0 %v203
    %v271 = vpop.f32.mrf.mxu0
    %v272 = vadd.f32 0.0, %v271
    %v273 = vpop.f32.mrf.mxu0
    %274 = vdwg.mxu0
    %v275 = vlaneseq
    %v276 = vshrl.u32 %v275, 7
    %v277 = vsub.s32 0, %v276
    %v278 = vrot.slane %v195, %v277
    %v279 = vsub.f32 %v272, %v278
    %v280 = vmul.f32 %v200, 0.5
    %v281 = vlaneseq
    %v282 = vshrl.u32 %v281, 7
    %v283 = vsub.s32 1, %v282
    %v284 = vrot.slane %v195, %v283
    %v285 = vmul.f32 %v280, %v284
    %v286 = vsub.f32 %v279, %v285
    %vm287 = vcmask 41984
    %288 = vst.msk [vmem:[#allocation2] sm:$0x3] %vm287, %v286
    // Predicated region
    $region18: #{steerable_forward_pallas.1} parent=1 // pred_check
      _
    $region19: #{steerable_forward_pallas.1} parent=1 // pred_check_branch
      %290 = sbr.rel (0) target = $region21
    $region20: #{steerable_forward_pallas.1} parent=1 // pred_region
      %s292 = ssub.s32 32, 32
      %293 = vsyncadd [#allocation3], %s292
      %s295 = sshll.u32 [#allocation2], 4
      %s296 = int_to_ptr.vmem [resolvable:$true] %s295
      %298 = dma.vmem_to_hbm [thread:$0]  %s296, 32, %s4, [#allocation3]
    $region21: #{steerable_forward_pallas.1} parent=1 // pred_fallthru
      _
    // Predicated region
    $region22: #{steerable_forward_pallas.1} parent=1 // pred_check
      _
    $region23: #{steerable_forward_pallas.1} parent=1 // pred_check_branch
      %300 = sbr.rel (0) target = $region25
    $region24: #{steerable_forward_pallas.1} parent=1 // pred_region
      %301 = dma.done [#allocation3], 32
    $region25: #{steerable_forward_pallas.1} parent=1 // pred_fallthru
      _
    %302 = vsyncpa [#allocation3], 1

</llo_original>
